<compile_context>
chip_gen: v5e
topology: v5e:2x2
jax: 0.10.0
libtpu: 0.0.40
codegen_flags: <defaults>
</compile_context>

<pallas_src>
import functools

import jax
import jax.numpy as jnp
from jax.experimental import pallas as pl
from jax.experimental.pallas import tpu as pltpu


def se_cat_kernel(x_ref, cat_ref, w1x_ref, w1c_ref, w2_ref, out_ref, *, inv_hw):
    # x_ref:   (bt, C, HW)      input tile (native dtype)
    # cat_ref: (bt, 1, CATC)    concatenated feature tile
    # w1x_ref: (C, HIDDEN)      first Linear weight, avg-pool half (pre-transposed)
    # w1c_ref: (CATC, HIDDEN)   first Linear weight, cat-feature half
    # w2_ref:  (HIDDEN, C)      second Linear weight (pre-transposed)
    # out_ref: (bt, C, HW)
    bt, c, hw = x_ref.shape
    x = x_ref[...]

    # Global average pool over the spatial (lane) axis.
    if x.dtype == jnp.float32:
        # f32 inputs: plain lane-axis reduce, no cast pass at all.
        y = jnp.sum(x, axis=-1) * inv_hw                                 # (bt, C) f32
    else:
        # bf16 / fp8 inputs: pool on the (otherwise idle) MXU with an f32
        # accumulator instead of materializing a full-tile f32 copy.
        ones = jnp.ones((hw, 1), dtype=x.dtype)
        y = (jnp.dot(x.reshape(bt * c, hw), ones,
                     preferred_element_type=jnp.float32)
             .reshape(bt, c) * inv_hw)                                   # (bt, C) f32

    cat = cat_ref[...][:, 0, :]                                          # (bt, CATC)

    # fc: Linear(no bias) -> ReLU -> Linear(no bias) -> Sigmoid.
    # Split matmul replaces the concatenate along the channel axis; operands
    # stay in native dtype, accumulation in f32 via preferred_element_type.
    h = (jnp.dot(y, w1x_ref[...], preferred_element_type=jnp.float32)
         + jnp.dot(cat, w1c_ref[...], preferred_element_type=jnp.float32))
    h = jnp.maximum(h, 0.0)
    s = jax.nn.sigmoid(jnp.dot(h, w2_ref[...],
                               preferred_element_type=jnp.float32))      # (bt, C)

    # Channel-wise scale in the input dtype (for bf16 inputs s is rounded to
    # bf16 before the multiply; acceptable for an SE gate).
    out_ref[...] = x * s.astype(x.dtype)[:, :, None]


def _vmem_capacity_bytes():
    """Physical per-core VMEM (64 MiB on v7x, 128 MiB on v5e/v6e)."""
    try:
        return int(pltpu.get_tpu_info().vmem_capacity_bytes)
    except Exception:
        return 128 << 20


def _pick_batch_tile(b, c, hw, itemsize, vmem_budget, min_steps=4):
    """Largest batch tile whose x block stays within ~budget/8 (≈8 MiB on v7x,
    ≈16 MiB on v5e/v6e) while keeping at least `min_steps` grid steps when B
    allows (pipelining + megacore sharding).  No divisibility requirement:
    the ragged final batch block is masked by Pallas on writeback."""
    per_sample = max(c * hw * itemsize, 1)
    target = max(vmem_budget // 8, per_sample)
    bt = max(1, min(b, target // per_sample))
    if b >= min_steps:
        bt = min(bt, max(1, b // min_steps))
    return int(bt)


def se_cat_layer(x, cat_feature, w1, w2, *, batch_tile=None):
    """x: (B, C, H, W); cat_feature: (B, CATC);
       w1: (hidden, C+CATC) torch-layout; w2: (C, hidden) torch-layout."""
    b, c, h, w = x.shape
    hw = h * w
    catc = cat_feature.shape[1]
    hidden = w1.shape[0]

    x_flat = x.reshape(b, c, hw)
    cat3 = cat_feature.reshape(b, 1, catc)   # keep last-two block dims = full dims

    # Pre-transpose torch Linear weights (out, in) -> (in, out) and split w1.
    w1_t = jnp.transpose(w1)                 # (C+CATC, hidden)
    w1x = w1_t[:c]                           # (C, hidden)
    w1c = w1_t[c:]                           # (CATC, hidden)
    w2_t = jnp.transpose(w2)                 # (hidden, C)

    itemsize = jnp.dtype(x.dtype).itemsize
    # Generation-aware VMEM budget: ~48 MiB on v7x, ~96 MiB on v5e/v6e.
    vmem_budget = (_vmem_capacity_bytes() * 3) // 4
    bt = batch_tile if batch_tile is not None else _pick_batch_tile(
        b, c, hw, itemsize, vmem_budget)
    grid = (pl.cdiv(b, bt),)

    block_bytes = bt * c * hw * itemsize
    # x-in + out, each double-buffered, plus weights/cat/headroom; always
    # clamped to the real per-core budget (never above physical VMEM).
    vmem_limit = 4 * block_bytes + (2 << 20)
    vmem_limit = int(min(max(vmem_limit, min(16 << 20, vmem_budget)), vmem_budget))

    cost = pl.CostEstimate(
        flops=2 * b * c * hw                                   # pool sum + scale mul
        + 2 * b * hidden * (c + catc) + 2 * b * hidden * c,    # tiny FCs
        transcendentals=b * c,                                 # sigmoid
        bytes_accessed=2 * b * c * hw * itemsize,              # one read + one write of x
    )

    kernel = functools.partial(se_cat_kernel, inv_hw=float(1.0 / hw))

    out_flat = pl.pallas_call(
        kernel,
        out_shape=jax.ShapeDtypeStruct((b, c, hw), x.dtype),
        grid=grid,
        in_specs=[
            pl.BlockSpec((bt, c, hw), lambda i: (i, 0, 0)),
            pl.BlockSpec((bt, 1, catc), lambda i: (i, 0, 0)),
            pl.BlockSpec((c, hidden), lambda i: (0, 0)),       # resident weights
            pl.BlockSpec((catc, hidden), lambda i: (0, 0)),
            pl.BlockSpec((hidden, c), lambda i: (0, 0)),
        ],
        out_specs=pl.BlockSpec((bt, c, hw), lambda i: (i, 0, 0)),
        compiler_params=pltpu.CompilerParams(
            dimension_semantics=("parallel",),
            vmem_limit_bytes=vmem_limit,
        ),
        cost_estimate=cost,
    )(x_flat, cat3, w1x, w1c, w2_t)

    return out_flat.reshape(b, c, h, w)


def reference(x, cat_feature, w1, w2):
    """Pure-JAX reference mirroring the PyTorch forward (bias=False Linears)."""
    y = jnp.mean(x, axis=(2, 3))                      # (B, C)
    z = jnp.concatenate([y, cat_feature], axis=1)     # (B, C+CATC)
    h = jnp.maximum(z @ w1.T, 0.0)                    # (B, hidden)
    s = jax.nn.sigmoid(h @ w2.T)                      # (B, C)
    return x * s[:, :, None, None]


if __name__ == "__main__":
    # Small shapes consistent with the module: channels divisible by reduction,
    # H*W a multiple of 128 so stores are lane-dense.
    B, C, H, W = 4, 32, 16, 16
    CATC = 8
    REDUCTION = 16
    HIDDEN = C // REDUCTION  # 2

    key = jax.random.PRNGKey(0)
    kx, kc, k1, k2, kx2, kc2 = jax.random.split(key, 6)

    x = jax.random.normal(kx, (B, C, H, W), dtype=jnp.float32)
    cat_feature = jax.random.normal(kc, (B, CATC), dtype=jnp.float32)

    # Deterministic "Linear" weights (torch layout: (out_features, in_features)).
    fan_in1 = C + CATC
    w1 = jax.random.uniform(k1, (HIDDEN, fan_in1), jnp.float32,
                            minval=-1.0, maxval=1.0) / jnp.sqrt(fan_in1)
    w2 = jax.random.uniform(k2, (C, HIDDEN), jnp.float32,
                            minval=-1.0, maxval=1.0) / jnp.sqrt(HIDDEN)

    ref = reference(x, cat_feature, w1, w2)

    # Explicit batch tile of 2 -> grid of 2, exercises the batch pipeline.
    out = jax.block_until_ready(se_cat_layer(x, cat_feature, w1, w2, batch_tile=2))
    assert out.shape == (B, C, H, W)
    assert jnp.allclose(out, ref, atol=1e-5, rtol=1e-5), "mismatch vs reference (tiled)"

    # Auto-picked tile (>= 4 grid steps when batch allows).
    out_auto = jax.block_until_ready(se_cat_layer(x, cat_feature, w1, w2))
    assert jnp.allclose(out_auto, ref, atol=1e-5, rtol=1e-5), "mismatch vs reference (auto)"

    # Ragged batch (no exact-divisibility requirement): B=5, tile=2 -> grid 3,
    # last block half-padded and masked on writeback.
    x5 = jax.random.normal(kx2, (5, C, H, W), dtype=jnp.float32)
    cat5 = jax.random.normal(kc2, (5, CATC), dtype=jnp.float32)
    ref5 = reference(x5, cat5, w1, w2)
    out5 = jax.block_until_ready(se_cat_layer(x5, cat5, w1, w2, batch_tile=2))
    assert jnp.allclose(out5, ref5, atol=1e-5, rtol=1e-5), "mismatch vs reference (ragged)"

    # bf16 path: MXU pool (no full-tile f32 upcast) + native-dtype FC operands.
    x_bf = x.astype(jnp.bfloat16)
    cat_bf = cat_feature.astype(jnp.bfloat16)
    ref_bf = reference(x_bf.astype(jnp.float32), cat_bf.astype(jnp.float32), w1, w2)
    out_bf = jax.block_until_ready(se_cat_layer(x_bf, cat_bf, w1, w2))
    assert out_bf.dtype == jnp.bfloat16
    assert jnp.allclose(out_bf.astype(jnp.float32), ref_bf, atol=5e-2, rtol=5e-2), \
        "mismatch vs reference (bf16)"

    print("KERNEL_OK")
</pallas_src>

<mosaic_0001>
module attributes {stable_mosaic.version = 11 : i64} {
  func.func @se_cat_kernel(%arg0: i32, %arg1: memref<2x32x256xf32, #tpu.memory_space<vmem>>, %arg2: memref<2x1x8xf32, #tpu.memory_space<vmem>>, %arg3: memref<32x2xf32, #tpu.memory_space<vmem>>, %arg4: memref<8x2xf32, #tpu.memory_space<vmem>>, %arg5: memref<2x32xf32, #tpu.memory_space<vmem>>, %arg6: memref<2x32x256xf32, #tpu.memory_space<vmem>>) attributes {dimension_semantics = [#tpu.dimension_semantics<parallel>], iteration_bounds = array<i64: 2>, scalar_prefetch = 0 : i64, scratch_operands = 0 : i64, tpu.core_type = #tpu.core_type<tc>, window_params = [{transform_indices = @transform_0, window_bounds = array<i64: 2, 32, 256>}, {transform_indices = @transform_1, window_bounds = array<i64: 2, 1, 8>}, {pipeline_mode = #tpu.pipeline_mode<synchronous>, transform_indices = @transform_2, window_bounds = array<i64: 32, 2>}, {pipeline_mode = #tpu.pipeline_mode<synchronous>, transform_indices = @transform_3, window_bounds = array<i64: 8, 2>}, {pipeline_mode = #tpu.pipeline_mode<synchronous>, transform_indices = @transform_4, window_bounds = array<i64: 2, 32>}, {transform_indices = @transform_5, window_bounds = array<i64: 2, 32, 256>}]} {
    %c0 = arith.constant 0 : index
    %c0_0 = arith.constant 0 : index
    %c0_1 = arith.constant 0 : index
    %0 = vector.load %arg1[%c0, %c0_0, %c0_1] : memref<2x32x256xf32, #tpu.memory_space<vmem>>, vector<2x32x256xf32>
    %cst = arith.constant dense<0.000000e+00> : vector<2x32xf32>
    %1 = vector.multi_reduction <add>, %0, %cst [2] : vector<2x32x256xf32> to vector<2x32xf32>
    %cst_2 = arith.constant 3.906250e-03 : f32
    %2 = vector.broadcast %cst_2 : f32 to vector<2x32xf32>
    %3 = arith.mulf %1, %2 : vector<2x32xf32>
    %c0_3 = arith.constant 0 : index
    %c0_4 = arith.constant 0 : index
    %c0_5 = arith.constant 0 : index
    %4 = vector.load %arg2[%c0_3, %c0_4, %c0_5] : memref<2x1x8xf32, #tpu.memory_space<vmem>>, vector<2x1x8xf32>
    %5 = vector.shape_cast %4 : vector<2x1x8xf32> to vector<2x8xf32>
    %c0_6 = arith.constant 0 : index
    %c0_7 = arith.constant 0 : index
    %6 = vector.load %arg3[%c0_6, %c0_7] : memref<32x2xf32, #tpu.memory_space<vmem>>, vector<32x2xf32>
    %cst_8 = arith.constant dense<0.000000e+00> : vector<2x2xf32>
    %7 = tpu.matmul %3, %6, %cst_8 {dimension_numbers = #tpu.dot_dimension_numbers<[1], [0], [0], [1], [0, 0, 1, 1], [], []>} : vector<2x32xf32>, vector<32x2xf32>, vector<2x2xf32> -> vector<2x2xf32>
    %c0_9 = arith.constant 0 : index
    %c0_10 = arith.constant 0 : index
    %8 = vector.load %arg4[%c0_9, %c0_10] : memref<8x2xf32, #tpu.memory_space<vmem>>, vector<8x2xf32>
    %cst_11 = arith.constant dense<0.000000e+00> : vector<2x2xf32>
    %9 = tpu.matmul %5, %8, %cst_11 {dimension_numbers = #tpu.dot_dimension_numbers<[1], [0], [0], [1], [0, 0, 1, 1], [], []>} : vector<2x8xf32>, vector<8x2xf32>, vector<2x2xf32> -> vector<2x2xf32>
    %10 = arith.addf %7, %9 : vector<2x2xf32>
    %cst_12 = arith.constant 0.000000e+00 : f32
    %11 = vector.broadcast %cst_12 : f32 to vector<2x2xf32>
    %12 = arith.maximumf %10, %11 : vector<2x2xf32>
    %c0_13 = arith.constant 0 : index
    %c0_14 = arith.constant 0 : index
    %13 = vector.load %arg5[%c0_13, %c0_14] : memref<2x32xf32, #tpu.memory_space<vmem>>, vector<2x32xf32>
    %cst_15 = arith.constant dense<0.000000e+00> : vector<2x32xf32>
    %14 = tpu.matmul %12, %13, %cst_15 {dimension_numbers = #tpu.dot_dimension_numbers<[1], [0], [0], [1], [0, 0, 1, 1], [], []>} : vector<2x2xf32>, vector<2x32xf32>, vector<2x32xf32> -> vector<2x32xf32>
    %15 = arith.negf %14 : vector<2x32xf32>
    %16 = math.exp %15 : vector<2x32xf32>
    %cst_16 = arith.constant 1.000000e+00 : f32
    %17 = vector.broadcast %cst_16 : f32 to vector<2x32xf32>
    %18 = arith.addf %17, %16 : vector<2x32xf32>
    %19 = arith.divf %17, %18 : vector<2x32xf32>
    %20 = vector.shape_cast %19 : vector<2x32xf32> to vector<2x32x1xf32>
    %21 = vector.broadcast %20 : vector<2x32x1xf32> to vector<2x32x256xf32>
    %22 = arith.mulf %0, %21 : vector<2x32x256xf32>
    %c0_17 = arith.constant 0 : index
    %c0_18 = arith.constant 0 : index
    %c0_19 = arith.constant 0 : index
    %23 = vector.load %arg6[%c0_17, %c0_18, %c0_19] : memref<2x32x256xf32, #tpu.memory_space<vmem>>, vector<2x32x256xf32>
    tpu.vector_store %arg6[%c0_17, %c0_18, %c0_19], %22 {strides = array<i32>} : memref<2x32x256xf32, #tpu.memory_space<vmem>>, vector<2x32x256xf32>,
    return
  }
  func.func @transform_0(%arg0: i32) -> (i32, i32, i32) {
    %c0_i32 = arith.constant 0 : i32
    %c0_i32_0 = arith.constant 0 : i32
    %c0_i32_1 = arith.constant 0 : i32
    return %arg0, %c0_i32, %c0_i32_0 : i32, i32, i32
  }
  func.func @transform_1(%arg0: i32) -> (i32, i32, i32) {
    %c0_i32 = arith.constant 0 : i32
    %c0_i32_0 = arith.constant 0 : i32
    %c0_i32_1 = arith.constant 0 : i32
    return %arg0, %c0_i32, %c0_i32_0 : i32, i32, i32
  }
  func.func @transform_2(%arg0: i32) -> (i32, i32) {
    %c0_i32 = arith.constant 0 : i32
    %c0_i32_0 = arith.constant 0 : i32
    %c0_i32_1 = arith.constant 0 : i32
    return %c0_i32, %c0_i32_0 : i32, i32
  }
  func.func @transform_3(%arg0: i32) -> (i32, i32) {
    %c0_i32 = arith.constant 0 : i32
    %c0_i32_0 = arith.constant 0 : i32
    %c0_i32_1 = arith.constant 0 : i32
    return %c0_i32, %c0_i32_0 : i32, i32
  }
  func.func @transform_4(%arg0: i32) -> (i32, i32) {
    %c0_i32 = arith.constant 0 : i32
    %c0_i32_0 = arith.constant 0 : i32
    %c0_i32_1 = arith.constant 0 : i32
    return %c0_i32, %c0_i32_0 : i32, i32
  }
  func.func @transform_5(%arg0: i32) -> (i32, i32, i32) {
    %c0_i32 = arith.constant 0 : i32
    %c0_i32_0 = arith.constant 0 : i32
    %c0_i32_1 = arith.constant 0 : i32
    return %arg0, %c0_i32, %c0_i32_0 : i32, i32, i32
  }
}

</mosaic_0001>

<llo_original>
// kernel: tpu_custom_call.1
$region0: #{tpu_custom_call.1}
  #allocation0 [shape = 'u32[]', space=smem, size = 0x4, offset = 0x4, fixed_abs, tag = 'smem constant byte address 0x4 - core index']
  #allocation1 [shape = 'u32[72,128]{1,0:T(1,128)}', space=vmem, size = 0x9000, scoped, tag = 'internal scratch']
  %s0 = inlined_call_operand.hbm [shape: f32[4,32,256], index: 0, kind: input, shape index: {}]
  %s1 = inlined_call_operand.vmem [shape: f32[4,1,8], index: 1, kind: input, shape index: {}]
  %s2 = inlined_call_operand.vmem [shape: f32[32,2], index: 2, kind: input, shape index: {}]
  %s3 = inlined_call_operand.vmem [shape: f32[8,2], index: 3, kind: input, shape index: {}]
  %s4 = inlined_call_operand.vmem [shape: f32[2,32], index: 4, kind: input, shape index: {}]
  %s5 = inlined_call_operand.hbm [shape: f32[4,32,256], index: 5, kind: output, shape index: {}]
  %s6 = sld [smem:[#allocation0]]
  $region57: #{tpu_custom_call.1} parent=0
    _
  %s8 = ssub.s32 1, %s6
  %s9 = scalar_select 0, %s8, %s6
  $region1: #{tpu_custom_call.1} parent=0
    #allocation2 [shape = 'u8[131072]{0}', space=vmem, size = 0x20000, scoped, tag = 'input window, operand 0']
    #allocation3 [shape = 's32[2]{0}', space=sflag, size = 0x8, scoped, tag = 'scoped memory for tpu_custom_call.1']
    #allocation4 [shape = 's32[2]{0}', space=sflag, size = 0x8, scoped, tag = 'scoped memory for tpu_custom_call.1']
    #allocation5 [shape = 'u8[131072]{0}', space=vmem, size = 0x20000, scoped, tag = 'output window, operand 0']
    %10 = vsyncpa [#allocation3], 0
    %s11 = scalar_lea.sflag [#allocation3], 1
    %12 = vsyncpa %s11, 0
    %13 = vsyncpa [#allocation4], 0
    %s14 = scalar_lea.sflag [#allocation4], 1
    %15 = vsyncpa %s14, 0
    loop: start=0, step=1, limit=4
    $region2: #{tpu_custom_call.1} parent=1 // loop_pre_header
      _
    $region3: #{tpu_custom_call.1} parent=1 // loop_header
      %s17 = sphi 0, %s21
      %p18 = scmp.ge.s32.totalorder %s17, 4
      %s27 = sphi 0, %s29
      %s30 = sphi 0, %s27
      %s31 = sphi 0, %s30
      %s47 = sphi 0, %s31
      %s53 = sphi 0, %s55
      %s56 = sphi 0, %s53
      %s57 = sphi 0, %s56
      %s73 = sphi 0, %s57
      %s77 = sphi 0, %s77
      %s79 = sphi 0, %s77
      %s80 = sphi 0, %s79
      %s94 = sphi 0, %s80
      %s98 = sphi 0, %s98
      %s100 = sphi 0, %s98
      %s101 = sphi 0, %s100
      %s115 = sphi 0, %s101
      %s119 = sphi 0, %s119
      %s121 = sphi 0, %s119
      %s122 = sphi 0, %s121
      %s136 = sphi 0, %s122
      %s142 = sphi 0, %s144
      %s145 = sphi 0, %s142
      %s146 = sphi 0, %s145
      %s162 = sphi 0, %s146
    $region4: #{tpu_custom_call.1} parent=1 // loop_header_branch
      %20 = sbr.rel (%p18) target = $region8
    $region5: #{tpu_custom_call.1} parent=1 // loop_body
      %s22 = ssub.s32 %s17, 1
      %s23 = ssub.s32 %s17, 2
      %s24 = sadd.s32 %s17, 1
      %s25 = ssub.s32 %s17, %s24
      %p26 = scmp.eq.s32.totalorder %s25, 0
      %s28 = sadd.s32 %s27, 1
      %s29 = scalar_select %p26, %s27, %s28
      %p32 = pneg %p26
      %p33 = scmp.eq.s32.totalorder %s17, 1
      %p34 = por %p32, %p33
      %p35 = scmp.ne.s32.totalorder %s27, %s30
      %p36 = scmp.eq.s32.totalorder %s17, 0
      %p37 = por %p35, %p36
      %p38 = scmp.ne.s32.totalorder %s27, %s30
      %p39 = scmp.eq.s32.totalorder %s22, 1
      %p40 = por %p38, %p39
      %p41 = scmp.ne.s32.totalorder %s30, %s31
      %p42 = scmp.eq.s32.totalorder %s22, 0
      %p43 = por %p41, %p42
      %p44 = scmp.ne.s32.totalorder %s30, %s31
      %p45 = scmp.eq.s32.totalorder %s23, 1
      %p46 = por %p44, %p45
      %p48 = scmp.ne.s32.totalorder %s31, %s47
      %p49 = scmp.eq.s32.totalorder %s23, 0
      %p50 = por %p48, %p49
      %s51 = ssub.s32 %s17, %s24
      %p52 = scmp.eq.s32.totalorder %s51, 0
      %s54 = sadd.s32 %s53, 1
      %s55 = scalar_select %p52, %s53, %s54
      %p58 = pneg %p52
      %p59 = scmp.eq.s32.totalorder %s17, 1
      %p60 = por %p58, %p59
      %p61 = scmp.ne.s32.totalorder %s53, %s56
      %p62 = scmp.eq.s32.totalorder %s17, 0
      %p63 = por %p61, %p62
      %p64 = scmp.ne.s32.totalorder %s53, %s56
      %p65 = scmp.eq.s32.totalorder %s22, 1
      %p66 = por %p64, %p65
      %p67 = scmp.ne.s32.totalorder %s56, %s57
      %p68 = scmp.eq.s32.totalorder %s22, 0
      %p69 = por %p67, %p68
      %p70 = scmp.ne.s32.totalorder %s56, %s57
      %p71 = scmp.eq.s32.totalorder %s23, 1
      %p72 = por %p70, %p71
      %p74 = scmp.ne.s32.totalorder %s57, %s73
      %p75 = scmp.eq.s32.totalorder %s23, 0
      %p76 = por %p74, %p75
      %s78 = sadd.s32 %s77, 1
      %p81 = scmp.eq.s32.totalorder %s17, 1
      %p82 = scmp.ne.s32.totalorder %s77, %s79
      %p83 = scmp.eq.s32.totalorder %s17, 0
      %p84 = por %p82, %p83
      %p85 = scmp.ne.s32.totalorder %s77, %s79
      %p86 = scmp.eq.s32.totalorder %s22, 1
      %p87 = por %p85, %p86
      %p88 = scmp.ne.s32.totalorder %s79, %s80
      %p89 = scmp.eq.s32.totalorder %s22, 0
      %p90 = por %p88, %p89
      %p91 = scmp.ne.s32.totalorder %s79, %s80
      %p92 = scmp.eq.s32.totalorder %s23, 1
      %p93 = por %p91, %p92
      %p95 = scmp.ne.s32.totalorder %s80, %s94
      %p96 = scmp.eq.s32.totalorder %s23, 0
      %p97 = por %p95, %p96
      %s99 = sadd.s32 %s98, 1
      %p102 = scmp.eq.s32.totalorder %s17, 1
      %p103 = scmp.ne.s32.totalorder %s98, %s100
      %p104 = scmp.eq.s32.totalorder %s17, 0
      %p105 = por %p103, %p104
      %p106 = scmp.ne.s32.totalorder %s98, %s100
      %p107 = scmp.eq.s32.totalorder %s22, 1
      %p108 = por %p106, %p107
      %p109 = scmp.ne.s32.totalorder %s100, %s101
      %p110 = scmp.eq.s32.totalorder %s22, 0
      %p111 = por %p109, %p110
      %p112 = scmp.ne.s32.totalorder %s100, %s101
      %p113 = scmp.eq.s32.totalorder %s23, 1
      %p114 = por %p112, %p113
      %p116 = scmp.ne.s32.totalorder %s101, %s115
      %p117 = scmp.eq.s32.totalorder %s23, 0
      %p118 = por %p116, %p117
      %s120 = sadd.s32 %s119, 1
      %p123 = scmp.eq.s32.totalorder %s17, 1
      %p124 = scmp.ne.s32.totalorder %s119, %s121
      %p125 = scmp.eq.s32.totalorder %s17, 0
      %p126 = por %p124, %p125
      %p127 = scmp.ne.s32.totalorder %s119, %s121
      %p128 = scmp.eq.s32.totalorder %s22, 1
      %p129 = por %p127, %p128
      %p130 = scmp.ne.s32.totalorder %s121, %s122
      %p131 = scmp.eq.s32.totalorder %s22, 0
      %p132 = por %p130, %p131
      %p133 = scmp.ne.s32.totalorder %s121, %s122
      %p134 = scmp.eq.s32.totalorder %s23, 1
      %p135 = por %p133, %p134
      %p137 = scmp.ne.s32.totalorder %s122, %s136
      %p138 = scmp.eq.s32.totalorder %s23, 0
      %p139 = por %p137, %p138
      %s140 = ssub.s32 %s17, %s24
      %p141 = scmp.eq.s32.totalorder %s140, 0
      %s143 = sadd.s32 %s142, 1
      %s144 = scalar_select %p141, %s142, %s143
      %p147 = pneg %p141
      %p148 = scmp.eq.s32.totalorder %s17, 1
      %p149 = por %p147, %p148
      %p150 = scmp.ne.s32.totalorder %s142, %s145
      %p151 = scmp.eq.s32.totalorder %s17, 0
      %p152 = por %p150, %p151
      %p153 = scmp.ne.s32.totalorder %s142, %s145
      %p154 = scmp.eq.s32.totalorder %s22, 1
      %p155 = por %p153, %p154
      %p156 = scmp.ne.s32.totalorder %s145, %s146
      %p157 = scmp.eq.s32.totalorder %s22, 0
      %p158 = por %p156, %p157
      %p159 = scmp.ne.s32.totalorder %s145, %s146
      %p160 = scmp.eq.s32.totalorder %s23, 1
      %p161 = por %p159, %p160
      %p163 = scmp.ne.s32.totalorder %s146, %s162
      %p164 = scmp.eq.s32.totalorder %s23, 0
      %p165 = por %p163, %p164
      %p166 = scmp.le.s32.totalorder 1, %s17
      %p167 = scmp.lt.s32.totalorder %s17, 3
      %p168 = pnand %p166, %p167
      %p169 = pneg %p168
      // Predicated region
      $region9: #{tpu_custom_call.1} parent=5 // pred_check
        _
      $region10: #{tpu_custom_call.1} parent=5 // pred_check_branch
        %171 = sbr.rel (%p168) target = $region12
      $region11: #{tpu_custom_call.1} parent=5 // pred_region
        %s172 = ssub.s32 %s17, 1
        // Predicated region
        $region13: #{tpu_custom_call.1} parent=11 // pred_check
          %p173 = pneg %p90
        $region14: #{tpu_custom_call.1} parent=11 // pred_check_branch
          %175 = sbr.rel (%p173) target = $region16
        $region15: #{tpu_custom_call.1} parent=11 // pred_region
          _
        $region16: #{tpu_custom_call.1} parent=11 // pred_fallthru
          _
        // Predicated region
        $region17: #{tpu_custom_call.1} parent=11 // pred_check
          %p176 = pneg %p111
        $region18: #{tpu_custom_call.1} parent=11 // pred_check_branch
          %178 = sbr.rel (%p176) target = $region20
        $region19: #{tpu_custom_call.1} parent=11 // pred_region
          _
        $region20: #{tpu_custom_call.1} parent=11 // pred_fallthru
          _
        // Predicated region
        $region21: #{tpu_custom_call.1} parent=11 // pred_check
          %p179 = pneg %p132
        $region22: #{tpu_custom_call.1} parent=11 // pred_check_branch
          %181 = sbr.rel (%p179) target = $region24
        $region23: #{tpu_custom_call.1} parent=11 // pred_region
          _
        $region24: #{tpu_custom_call.1} parent=11 // pred_fallthru
          _
      $region12: #{tpu_custom_call.1} parent=5 // pred_fallthru
        _
      %p182 = scmp.lt.s32.totalorder %s17, 2
      // Predicated region
      $region25: #{tpu_custom_call.1} parent=5 // pred_check
        %p183 = pneg %p182
      $region26: #{tpu_custom_call.1} parent=5 // pred_check_branch
        %185 = sbr.rel (%p183) target = $region28
      $region27: #{tpu_custom_call.1} parent=5 // pred_region
        // Predicated region
        $region29: #{tpu_custom_call.1} parent=27 // pred_check
          %p186 = pneg %p37
        $region30: #{tpu_custom_call.1} parent=27 // pred_check_branch
          %188 = sbr.rel (%p186) target = $region32
        $region31: #{tpu_custom_call.1} parent=27 // pred_region
          %s189 = sand.u32 %s27, 1
          %s190 = scalar_lea.sflag [#allocation3], %s189
          %s191 = sand.u32 %s27, 1
          %s192 = smul.addr %s191, 128
          %s193 = scalar_lea.vmem [#allocation2], %s192
          %s194 = smul.u32 2, %s17
          %196 = vsyncadd %s190, 0
          %s197 = smul.addr %s194, 8
          %s198 = smul.addr %s197, 8
          %s199 = scalar_lea.hbm %s0, %s198
          %s200 = sshll.u32 %s199, 4
          %s201 = int_to_ptr.hbm [resolvable:$true] %s200
          %s202 = sshll.u32 %s193, 4
          %s203 = int_to_ptr.vmem [resolvable:$true] %s202
          %208 = dma.hbm_to_vmem [thread:$0]  %s201, 2048, %s203, %s190, 256, 256, 16
        $region32: #{tpu_custom_call.1} parent=27 // pred_fallthru
          _
        // Predicated region
        $region33: #{tpu_custom_call.1} parent=27 // pred_check
          %p209 = pneg %p63
        $region34: #{tpu_custom_call.1} parent=27 // pred_check_branch
          %211 = sbr.rel (%p209) target = $region36
        $region35: #{tpu_custom_call.1} parent=27 // pred_region
          %s212 = smul.u32 2, %s17
          %p213 = scmp.lt.s32.totalorder %s212, 3
          %s214 = scalar_select %p213, %s212, 3
          %s215 = scalar_lea.vmem %s1, %s214
          %s216 = smul.u32 2, %s17
        $region36: #{tpu_custom_call.1} parent=27 // pred_fallthru
          _
      $region28: #{tpu_custom_call.1} parent=5 // pred_fallthru
        _
      %p217 = scmp.le.s32.totalorder 1, %s17
      %p218 = scmp.lt.s32.totalorder %s17, 3
      %p219 = pnand %p217, %p218
      %p220 = pneg %p219
      // Predicated region
      $region37: #{tpu_custom_call.1} parent=5 // pred_check
        _
      $region38: #{tpu_custom_call.1} parent=5 // pred_check_branch
        %222 = sbr.rel (%p219) target = $region40
      $region39: #{tpu_custom_call.1} parent=5 // pred_region
        %s223 = ssub.s32 %s17, 1
        %s224 = sand.u32 %s30, 1
        %s225 = scalar_lea.sflag [#allocation3], %s224
        %s226 = sand.u32 %s30, 1
        %s227 = smul.addr %s226, 128
        %s228 = scalar_lea.vmem [#allocation2], %s227
        // Predicated region
        $region41: #{tpu_custom_call.1} parent=39 // pred_check
          %p229 = pneg %p43
        $region42: #{tpu_custom_call.1} parent=39 // pred_check_branch
          %231 = sbr.rel (%p229) target = $region44
        $region43: #{tpu_custom_call.1} parent=39 // pred_region
          %233 = dma.done %s225, 2048
        $region44: #{tpu_custom_call.1} parent=39 // pred_fallthru
          _
        %s234 = sand.u32 %s30, 1
        %s235 = scalar_lea.sflag [#allocation3], %s234
        %s236 = sand.u32 %s30, 1
        %s237 = smul.addr %s236, 128
        %s238 = scalar_lea.vmem [#allocation2], %s237
        %p239 = pneg %p43
        %p240 = pneg %p40
        %s241 = smul.u32 2, %s22
        %p242 = scmp.lt.s32.totalorder %s241, 3
        %s243 = scalar_select %p242, %s241, 3
        %s244 = scalar_lea.vmem %s1, %s243
        %p245 = pneg %p69
        %p246 = pneg %p66
        %p247 = pneg %p90
        %p248 = pneg %p87
        %p249 = pneg %p111
        %p250 = pneg %p108
        %p251 = pneg %p132
        %p252 = pneg %p129
        %p253 = pneg %p158
        %p254 = pneg %p155
        %s255 = sand.u32 %s145, 1
        %s256 = scalar_lea.sflag [#allocation4], %s255
        %s257 = sand.u32 %s145, 1
        %s258 = smul.addr %s257, 128
        %s259 = scalar_lea.vmem [#allocation5], %s258
        %s260 = smul.u32 2, %s22
        %s261 = smul.u32 2, %s22
        %p262 = scmp.lt.s32.totalorder %s261, 3
        %s263 = scalar_select %p262, %s261, 3
        %s264 = scalar_lea.vmem %s1, %s263
        %s265 = smul.u32 2, %s22
        %s266 = smul.u32 2, %s22
        %v267 = vld [vmem:[%s228] sm:$0xff]
        %v268 = vld [vmem:[%s228 + $0x8] sm:$0xff]
        %v269 = vld [vmem:[%s228 + $0x10] sm:$0xff]
        %v270 = vld [vmem:[%s228 + $0x18] sm:$0xff]
        %v271 = vld [vmem:[%s228 + $0x20] sm:$0xff]
        %v272 = vld [vmem:[%s228 + $0x28] sm:$0xff]
        %v273 = vld [vmem:[%s228 + $0x30] sm:$0xff]
        %v274 = vld [vmem:[%s228 + $0x38] sm:$0xff]
        %v275 = vld [vmem:[%s228 + $0x40] sm:$0xff]
        %v276 = vld [vmem:[%s228 + $0x48] sm:$0xff]
        %v277 = vld [vmem:[%s228 + $0x50] sm:$0xff]
        %v278 = vld [vmem:[%s228 + $0x58] sm:$0xff]
        %v279 = vld [vmem:[%s228 + $0x60] sm:$0xff]
        %v280 = vld [vmem:[%s228 + $0x68] sm:$0xff]
        %v281 = vld [vmem:[%s228 + $0x70] sm:$0xff]
        %v282 = vld [vmem:[%s228 + $0x78] sm:$0xff]
        %v283 = vadd.f32 %v267, %v268
        %284 = vadd.xlane.f32.xlu0 %v283
        %v285 = vpop.xlane.xlu0 %284
        %v286 = vadd.f32 %v269, %v270
        %287 = vadd.xlane.f32.xlu0 %v286
        %v288 = vpop.xlane.xlu0 %287
        %v289 = vadd.f32 %v271, %v272
        %290 = vadd.xlane.f32.xlu0 %v289
        %v291 = vpop.xlane.xlu0 %290
        %v292 = vadd.f32 %v273, %v274
        %293 = vadd.xlane.f32.xlu0 %v292
        %v294 = vpop.xlane.xlu0 %293
        %v295 = vadd.f32 %v275, %v276
        %296 = vadd.xlane.f32.xlu0 %v295
        %v297 = vpop.xlane.xlu0 %296
        %v298 = vadd.f32 %v277, %v278
        %299 = vadd.xlane.f32.xlu0 %v298
        %v300 = vpop.xlane.xlu0 %299
        %v301 = vadd.f32 %v279, %v280
        %302 = vadd.xlane.f32.xlu0 %v301
        %v303 = vpop.xlane.xlu0 %302
        %v304 = vadd.f32 %v281, %v282
        %305 = vadd.xlane.f32.xlu0 %v304
        %v306 = vpop.xlane.xlu0 %305
        %v307 = vmul.f32 %v285, 0.00390625
        %v308 = vmul.f32 %v288, 0.00390625
        %v309 = vmul.f32 %v291, 0.00390625
        %v310 = vmul.f32 %v294, 0.00390625
        %v311 = vmul.f32 %v297, 0.00390625
        %v312 = vmul.f32 %v300, 0.00390625
        %v313 = vmul.f32 %v303, 0.00390625
        %v314 = vmul.f32 %v306, 0.00390625
        %v315 = vld [vmem:[%s264] sm:$0x1]
        %v316 = vld [vmem:[%s264 + $0x1] sm:$0x1]
        %v317 = vld [vmem:[%s2] sm:$0xff]
        %v318 = vld [vmem:[%s2 + $0x8] sm:$0xff]
        %v319 = vld [vmem:[%s2 + $0x10] sm:$0xff]
        %v320 = vld [vmem:[%s2 + $0x18] sm:$0xff]
        %v321 = vld [vmem:[%s3] sm:$0xff]
        %324 = vst [vmem:[#allocation1] ss:$9 sm:$0xff] %v315
        %s325 = scalar_lea.vmem [#allocation1], 1
        %326 = vst [vmem:[%s325] ss:$9 sm:$0xff] %v316
        %v327 = vld [vmem:[#allocation1] sm:$0xff]
        %vm328 = vcmask 64512
        %v329 = vsel %vm328, %v327, 0
        %331 = vmatpush.msra.mxu0 0.0
        %332 = vmatpush.msra.mxu0 0.0
        %333 = vmatpush.msra.mxu0 0.0
        %334 = vmatpush.msra.mxu0 0.0
        %335 = vmatpush.msra.mxu0 0.0
        %336 = vmatpush.msra.mxu0 0.0
        %337 = vmatpush.msra.mxu0 0.0
        %338 = vmatpush.msra.mxu0 0.0
        %339 = vmatpush.msra.mxu0 0.0
        %340 = vmatpush.msra.mxu0 0.0
        %341 = vmatpush.msra.mxu0 0.0
        %342 = vmatpush.msra.mxu0 0.0
        %343 = vmatpush.msra.mxu0 0.0
        %344 = vmatpush.msra.mxu0 0.0
        %345 = vmatpush.msra.mxu0 0.0
        %346 = vmatpush.msra.mxu0 %v321
        %347 = vmatmul.f32.gmra.mxu0 %v329
        %v348 = vpop.f32.mrf.mxu0
        %v349 = vadd.f32 0.0, %v348
        %350 = vdwg.mxu0
        %v359 = vlaneseq
        %v360 = vand.u32 %v359, 127
        %v361 = vperm.slane %v307, %v360
        %v362 = vadd.s32 %v360, 4294967288
        %v363 = vperm.slane %v308, %v362
        %vm364 = vcmask 130112
        %v365 = vsel %vm364, %v363, %v361
        %v366 = vadd.s32 %v360, 4294967280
        %v367 = vperm.slane %v309, %v366
        %vm368 = vcmask 195712
        %v369 = vsel %vm368, %v367, %v365
        %v370 = vadd.s32 %v360, 4294967272
        %v371 = vperm.slane %v310, %v370
        %vm372 = vcmask 261312
        %v373 = vsel %vm372, %v371, %v369
        %v374 = vperm.slane %v311, %v360
        %v375 = vperm.slane %v312, %v362
        %v376 = vsel %vm364, %v375, %v374
        %v377 = vperm.slane %v313, %v366
        %v378 = vsel %vm368, %v377, %v376
        %v379 = vperm.slane %v314, %v370
        %v380 = vsel %vm372, %v379, %v378
        %vm381 = vcmask 1041409
        %v382 = vsel %vm381, %v380, %v373
        %vm383 = vcmask 261120
        %v384 = vsel %vm383, %v382, 0
        %386 = vmatpush.msra.mxu0 0.0
        %387 = vmatpush.msra.mxu0 0.0
        %388 = vmatpush.msra.mxu0 0.0
        %389 = vmatpush.msra.mxu0 0.0
        %390 = vmatpush.msra.mxu0 0.0
        %391 = vmatpush.msra.mxu0 0.0
        %392 = vmatpush.msra.mxu0 0.0
        %393 = vmatpush.msra.mxu0 0.0
        %394 = vmatpush.msra.mxu0 0.0
        %395 = vmatpush.msra.mxu0 0.0
        %396 = vmatpush.msra.mxu0 0.0
        %397 = vmatpush.msra.mxu0 0.0
        %398 = vmatpush.msra.mxu0 %v320
        %399 = vmatpush.msra.mxu0 %v319
        %400 = vmatpush.msra.mxu0 %v318
        %401 = vmatpush.msra.mxu0 %v317
        %402 = vmatmul.f32.gmra.mxu0 %v384
        %v403 = vpop.f32.mrf.mxu0
        %v404 = vadd.f32 %v349, %v403
        %405 = vdwg.mxu0
        %v406 = vmax.f32 %v404, 0.0
        %v407 = vld [vmem:[%s4] sm:$0x3]
        %vm408 = vcmask 15360
        %v410 = vsel %vm408, %v406, 0
        %vm412 = vcmask 1041408
        %v414 = vsel %vm412, %v407, 0
        %416 = vmatpush.msra.mxu0 0.0
        %417 = vmatpush.msra.mxu0 0.0
        %418 = vmatpush.msra.mxu0 0.0
        %419 = vmatpush.msra.mxu0 0.0
        %420 = vmatpush.msra.mxu0 0.0
        %421 = vmatpush.msra.mxu0 0.0
        %422 = vmatpush.msra.mxu0 0.0
        %423 = vmatpush.msra.mxu0 0.0
        %424 = vmatpush.msra.mxu0 0.0
        %425 = vmatpush.msra.mxu0 0.0
        %426 = vmatpush.msra.mxu0 0.0
        %427 = vmatpush.msra.mxu0 0.0
        %428 = vmatpush.msra.mxu0 0.0
        %429 = vmatpush.msra.mxu0 0.0
        %430 = vmatpush.msra.mxu0 0.0
        %431 = vmatpush.msra.mxu0 %v414
        %432 = vmatmul.f32.gmra.mxu0 %v410
        %v433 = vpop.f32.mrf.mxu0
        %v434 = vadd.f32 0.0, %v433
        %435 = vdwg.mxu0
        %v436 = vxor.u32 %v434, 2147483648
        %v437 = vmul.f32 %v436, 1.442695
        %v438 = vpow.pop %v437
        %v439 = vadd.f32 %v438, 1.0
        %v440 = vrcp.pop %v439
        %v441 = vmul.f32 %v439, %v440
        %v442 = vsub.f32 1.0, %v441
        %v443 = vmul.f32 %v440, %v442
        %v444 = vadd.f32 %v440, %v443
        %vm445 = vweird.f32 %v439
        %vm446 = vweird.f32 %v440
        %vm447 = vmor %vm445, %vm446
        %v448 = vsel %vm447, %v440, %v444
        %v449 = vand.u32 2147483647, %v439
        %vm450 = vcmp.eq.f32.partialorder %v449, 8.507059e+37
        %v451 = vand.u32 %v439, 2147483648
        %v452 = vor.u32 1.1754944e-38, %v451
        %v453 = vsel %vm450, %v452, %v448
        %v454 = vmul.f32 1.0, %v453
        %v455 = vperm.slane %v454, 0
        %v456 = vlaneseq
        %v457 = vshrl.u32 %v456, 7
        %459 = vset.pattern.permute.xlu0 %v457
        %460 = vperm.xlu0 %459, %v455
        %v461 = vpop.permute.xlu0 %460
        %v462 = vlaneseq
        %v463 = vshrl.u32 %v462, 7
        %v464 = vadd.s32 %v463, 8
        %465 = vset.pattern.permute.xlu0 %v464
        %466 = vperm.xlu0 %465, %v455
        %v467 = vpop.permute.xlu0 %466
        %v468 = vlaneseq
        %v469 = vshrl.u32 %v468, 7
        %v470 = vadd.s32 %v469, 16
        %471 = vset.pattern.permute.xlu0 %v470
        %472 = vperm.xlu0 %471, %v455
        %v473 = vpop.permute.xlu0 %472
        %v474 = vlaneseq
        %v475 = vshrl.u32 %v474, 7
        %v476 = vadd.s32 %v475, 24
        %477 = vset.pattern.permute.xlu0 %v476
        %478 = vperm.xlu0 %477, %v455
        %v479 = vpop.permute.xlu0 %478
        %v480 = vperm.slane %v454, 1
        %v481 = vlaneseq
        %v482 = vshrl.u32 %v481, 7
        %484 = vset.pattern.permute.xlu0 %v482
        %485 = vperm.xlu0 %484, %v480
        %v486 = vpop.permute.xlu0 %485
        %v487 = vlaneseq
        %v488 = vshrl.u32 %v487, 7
        %v489 = vadd.s32 %v488, 8
        %490 = vset.pattern.permute.xlu0 %v489
        %491 = vperm.xlu0 %490, %v480
        %v492 = vpop.permute.xlu0 %491
        %v493 = vlaneseq
        %v494 = vshrl.u32 %v493, 7
        %v495 = vadd.s32 %v494, 16
        %496 = vset.pattern.permute.xlu0 %v495
        %497 = vperm.xlu0 %496, %v480
        %v498 = vpop.permute.xlu0 %497
        %v499 = vlaneseq
        %v500 = vshrl.u32 %v499, 7
        %v501 = vadd.s32 %v500, 24
        %502 = vset.pattern.permute.xlu0 %v501
        %503 = vperm.xlu0 %502, %v480
        %v504 = vpop.permute.xlu0 %503
        %v505 = vmul.f32 %v267, %v461
        %v506 = vmul.f32 %v268, %v461
        %v507 = vmul.f32 %v269, %v467
        %v508 = vmul.f32 %v270, %v467
        %v509 = vmul.f32 %v271, %v473
        %v510 = vmul.f32 %v272, %v473
        %v511 = vmul.f32 %v273, %v479
        %v512 = vmul.f32 %v274, %v479
        %v513 = vmul.f32 %v275, %v486
        %v514 = vmul.f32 %v276, %v486
        %v515 = vmul.f32 %v277, %v492
        %v516 = vmul.f32 %v278, %v492
        %v517 = vmul.f32 %v279, %v498
        %v518 = vmul.f32 %v280, %v498
        %v519 = vmul.f32 %v281, %v504
        %v520 = vmul.f32 %v282, %v504
        %521 = vst [vmem:[%s259] sm:$0xff] %v505
        %522 = vst [vmem:[%s259 + $0x8] sm:$0xff] %v506
        %523 = vst [vmem:[%s259 + $0x10] sm:$0xff] %v507
        %524 = vst [vmem:[%s259 + $0x18] sm:$0xff] %v508
        %525 = vst [vmem:[%s259 + $0x20] sm:$0xff] %v509
        %526 = vst [vmem:[%s259 + $0x28] sm:$0xff] %v510
        %527 = vst [vmem:[%s259 + $0x30] sm:$0xff] %v511
        %528 = vst [vmem:[%s259 + $0x38] sm:$0xff] %v512
        %529 = vst [vmem:[%s259 + $0x40] sm:$0xff] %v513
        %530 = vst [vmem:[%s259 + $0x48] sm:$0xff] %v514
        %531 = vst [vmem:[%s259 + $0x50] sm:$0xff] %v515
        %532 = vst [vmem:[%s259 + $0x58] sm:$0xff] %v516
        %533 = vst [vmem:[%s259 + $0x60] sm:$0xff] %v517
        %534 = vst [vmem:[%s259 + $0x68] sm:$0xff] %v518
        %535 = vst [vmem:[%s259 + $0x70] sm:$0xff] %v519
        %536 = vst [vmem:[%s259 + $0x78] sm:$0xff] %v520
        %s537 = sand.u32 %s145, 1
        %s538 = scalar_lea.sflag [#allocation4], %s537
        %s539 = sand.u32 %s145, 1
        %s540 = smul.addr %s539, 128
        %s541 = scalar_lea.vmem [#allocation5], %s540
        // Predicated region
        $region45: #{tpu_custom_call.1} parent=39 // pred_check
          %p542 = pneg %p155
        $region46: #{tpu_custom_call.1} parent=39 // pred_check_branch
          %544 = sbr.rel (%p542) target = $region48
        $region47: #{tpu_custom_call.1} parent=39 // pred_region
          %s545 = smul.u32 2, %s22
          %547 = vsyncadd %s538, 0
          %s548 = smul.addr %s545, 8
          %s549 = smul.addr %s548, 8
          %s550 = scalar_lea.hbm %s5, %s549
          %s551 = sshll.u32 %s541, 4
          %s552 = int_to_ptr.vmem [resolvable:$true] %s551
          %s553 = sshll.u32 %s550, 4
          %s554 = int_to_ptr.hbm [resolvable:$true] %s553
          %559 = dma.vmem_to_hbm [thread:$0]  %s552, 2048, %s554, %s538, 256, 256, 16
        $region48: #{tpu_custom_call.1} parent=39 // pred_fallthru
          _
      $region40: #{tpu_custom_call.1} parent=5 // pred_fallthru
        _
      %p560 = scmp.le.s32.totalorder 2, %s17
      // Predicated region
      $region49: #{tpu_custom_call.1} parent=5 // pred_check
        %p561 = pneg %p560
      $region50: #{tpu_custom_call.1} parent=5 // pred_check_branch
        %563 = sbr.rel (%p561) target = $region52
      $region51: #{tpu_custom_call.1} parent=5 // pred_region
        %s564 = ssub.s32 %s17, 2
        // Predicated region
        $region53: #{tpu_custom_call.1} parent=51 // pred_check
          %p565 = pneg %p161
        $region54: #{tpu_custom_call.1} parent=51 // pred_check_branch
          %567 = sbr.rel (%p565) target = $region56
        $region55: #{tpu_custom_call.1} parent=51 // pred_region
          %s568 = sand.u32 %s146, 1
          %s569 = scalar_lea.sflag [#allocation4], %s568
          %s570 = sand.u32 %s146, 1
          %s571 = smul.addr %s570, 128
          %s572 = scalar_lea.vmem [#allocation5], %s571
          %574 = dma.done %s569, 2048
        $region56: #{tpu_custom_call.1} parent=51 // pred_fallthru
          _
      $region52: #{tpu_custom_call.1} parent=5 // pred_fallthru
        _
    $region6: #{tpu_custom_call.1} parent=1 // loop_footer
      %s21 = sadd.s32 1, %s17
    $region7: #{tpu_custom_call.1} parent=1 // loop_footer_branch
      %16 = sbr.rel target = $region3
    $region8: #{tpu_custom_call.1} parent=1 // loop_exit
      _
    %575 = vsyncpa [#allocation3], 1
    %s576 = scalar_lea.sflag [#allocation3], 1
    %577 = vsyncpa %s576, 1
    %578 = vsyncpa [#allocation4], 1
    %s579 = scalar_lea.sflag [#allocation4], 1
    %580 = vsyncpa %s579, 1

</llo_original>
